<compile_context>
chip_gen: v7x
topology: tpu7x:2x2x1
jax: 0.10.0
libtpu: 0.0.40
codegen_flags: <defaults>
</compile_context>

<pallas_src>
from functools import partial

import jax
import jax.numpy as jnp
from jax import lax
from jax.experimental import pallas as pl
from jax.experimental.pallas import tpu as pltpu


def _regressor_kernel(w_ref, b_ref, x_ref, o_ref):
    """Fused regressor: o[0, :] = x_tile @ w_c + b_c, written lane-dense.

    w_ref : (1, D)   VMEM f32, resident across all grid steps
    b_ref : (1, 1)   SMEM f32 scalar
    x_ref : (TB, D)  VMEM, one batch tile
    o_ref : (1, TB)  VMEM, transposed (lane-dense) output tile
    """
    x = x_ref[...].astype(jnp.float32)
    # (1, D) . (TB, D) contracting over D -> (1, TB); keeps batch on lanes.
    out_t = lax.dot_general(
        w_ref[...],
        x,
        dimension_numbers=(((1,), (1,)), ((), ())),
        preferred_element_type=jnp.float32,
    )
    o_ref[...] = (out_t + b_ref[0, 0]).astype(o_ref.dtype)


def fold_regressor_params(w1, b1, w2, b2):
    """ONE-TIME init-step fold of fc_1∘fc_2 into a single affine map.

    Weights use the (in, out) layout (PyTorch nn.Linear stores (out, in); the
    caller transposes once at init).  Kept in f32 for exact accumulation and
    to avoid bf16 elementwise work on v5e.
    """
    w1f = w1.astype(jnp.float32)
    b1f = b1.astype(jnp.float32)
    w2f = w2.astype(jnp.float32)
    b2f = b2.astype(jnp.float32)
    w_c = (w1f @ w2f).reshape(1, -1)                 # (1, D)
    b_c = (b1f @ w2f + b2f).reshape(1, 1)            # (1, 1)
    return w_c, b_c


# Whole-x single block whenever the (double-buffer-conservative) footprint is
# tiny -- which it always is for realistic batches of this module.
_DEFAULT_SINGLE_BLOCK_BYTES = 4 * 1024 * 1024


def _pick_batch_tile(B, D, itemsize, max_single_block_bytes):
    if B * D * itemsize * 2 <= max_single_block_bytes:
        return B                                     # grid=(1,): no pipeline
    for tile in (4096, 2048, 1024, 512, 256, 128):
        if B % tile == 0 and tile * D * itemsize * 2 <= max_single_block_bytes:
            return tile
    return B                                         # odd batch: one full block


@partial(jax.jit, static_argnames=("max_single_block_bytes",))
def regressor_forward(x, w_c, b_c, *,
                      max_single_block_bytes=_DEFAULT_SINGLE_BLOCK_BYTES):
    """x: (B, D); w_c: (1, D); b_c: (1, 1)  ->  (B, 1)."""
    B, D = x.shape
    w_c = w_c.reshape(1, D).astype(jnp.float32)
    b_c = b_c.reshape(1, 1).astype(jnp.float32)

    tb = _pick_batch_tile(B, D, x.dtype.itemsize, max_single_block_bytes)
    grid = (B // tb,)

    out_t = pl.pallas_call(
        _regressor_kernel,
        out_shape=jax.ShapeDtypeStruct((1, B), x.dtype),
        grid_spec=pltpu.PrefetchScalarGridSpec(
            num_scalar_prefetch=0,
            grid=grid,
            in_specs=[
                # fused weight row: resident in VMEM across the grid
                pl.BlockSpec((1, D), lambda i: (0, 0)),
                # fused bias: single scalar in SMEM
                pl.BlockSpec((1, 1), lambda i: (0, 0),
                             memory_space=pltpu.MemorySpace.SMEM),
                # batch tile of the input (the only large operand)
                pl.BlockSpec((tb, D), lambda i: (i, 0)),
            ],
            # lane-dense transposed output tile
            out_specs=pl.BlockSpec((1, tb), lambda i: (0, i)),
        ),
        compiler_params=pltpu.CompilerParams(
            # launch-bound op: do not shard the (usually size-1) grid across
            # TensorCores on v7x.
            dimension_semantics=("arbitrary",),
        ),
    )(w_c, b_c, x)

    # Free layout plumbing back to the module's (B, 1) output.
    return out_t.reshape(B, 1)


def regressor_reference(x, w1, b1, w2, b2):
    hidden = x @ w1 + b1
    return hidden @ w2 + b2


if __name__ == "__main__":
    # Shapes consistent with the module: opt.rnn_size = 32 -> hidden 256 -> 1.
    D, H, O = 32, 256, 1
    key = jax.random.PRNGKey(0)
    kx1, kx2, kw1, kb1, kw2, kb2 = jax.random.split(key, 6)

    # PyTorch nn.Linear stores (out, in); we keep the (in, out) layout here
    # (a one-time transpose at init on the PyTorch side).
    w1 = jax.random.normal(kw1, (D, H), dtype=jnp.float32) * 0.05
    b1 = jax.random.normal(kb1, (1, H), dtype=jnp.float32) * 0.05
    w2 = jax.random.normal(kw2, (H, O), dtype=jnp.float32) * 0.05
    b2 = jax.random.normal(kb2, (1, O), dtype=jnp.float32) * 0.05

    # One-time fold, hoisted out of the per-call path.
    w_c, b_c = fold_regressor_params(w1, b1, w2, b2)

    def check(x, **kw):
        out = regressor_forward(x, w_c, b_c, **kw)
        jax.block_until_ready(out)
        ref = regressor_reference(x, w1, b1, w2, b2)
        assert out.shape == (x.shape[0], O)
        assert jnp.allclose(out, ref, atol=1e-4, rtol=1e-3), "mismatch vs reference"

    x_small = jax.random.normal(kx1, (8, D), dtype=jnp.float32)
    x_big = jax.random.normal(kx2, (1024, D), dtype=jnp.float32)

    check(x_small)                                   # tiny batch, grid=(1,)
    check(x_big)                                     # 1024-batch, still grid=(1,)
    # Compile-test the tiled fallback path by artificially shrinking the
    # single-block budget: tb=256 -> grid=(4,).
    check(x_big, max_single_block_bytes=64 * 1024)

    print("KERNEL_OK")
</pallas_src>

<mosaic_0001>
module attributes {stable_mosaic.version = 11 : i64} {
  func.func @_regressor_kernel(%arg0: i32, %arg1: memref<1x32xf32, #tpu.memory_space<vmem>>, %arg2: memref<1x1xf32, #tpu.memory_space<smem>>, %arg3: memref<8x32xf32, #tpu.memory_space<vmem>>, %arg4: memref<1x8xf32, #tpu.memory_space<vmem>>) attributes {dimension_semantics = [#tpu.dimension_semantics<arbitrary>], iteration_bounds = array<i64: 1>, scalar_prefetch = 0 : i64, scratch_operands = 0 : i64, tpu.core_type = #tpu.core_type<tc>, window_params = [{pipeline_mode = #tpu.pipeline_mode<synchronous>, transform_indices = @transform_0, window_bounds = array<i64: 1, 32>}, {transform_indices = @transform_1, window_bounds = array<i64: 1, 1>}, {transform_indices = @transform_2, window_bounds = array<i64: 8, 32>}, {transform_indices = @transform_3, window_bounds = array<i64: 1, 8>}]} {
    %c0 = arith.constant 0 : index
    %c0_0 = arith.constant 0 : index
    %0 = vector.load %arg3[%c0, %c0_0] : memref<8x32xf32, #tpu.memory_space<vmem>>, vector<8x32xf32>
    %c0_1 = arith.constant 0 : index
    %c0_2 = arith.constant 0 : index
    %1 = vector.load %arg1[%c0_1, %c0_2] : memref<1x32xf32, #tpu.memory_space<vmem>>, vector<1x32xf32>
    %cst = arith.constant dense<0.000000e+00> : vector<1x8xf32>
    %2 = tpu.matmul %1, %0, %cst {dimension_numbers = #tpu.dot_dimension_numbers<[1], [1], [0], [0], [0, 0, 1, 0], [], []>} : vector<1x32xf32>, vector<8x32xf32>, vector<1x8xf32> -> vector<1x8xf32>
    %c0_3 = arith.constant 0 : index
    %c0_4 = arith.constant 0 : index
    %3 = memref.load %arg2[%c0_3, %c0_4] : memref<1x1xf32, #tpu.memory_space<smem>>
    %4 = vector.broadcast %3 : f32 to vector<1x8xf32>
    %5 = arith.addf %2, %4 : vector<1x8xf32>
    %c0_5 = arith.constant 0 : index
    %c0_6 = arith.constant 0 : index
    %6 = vector.load %arg4[%c0_5, %c0_6] : memref<1x8xf32, #tpu.memory_space<vmem>>, vector<1x8xf32>
    tpu.vector_store %arg4[%c0_5, %c0_6], %5 {strides = array<i32>} : memref<1x8xf32, #tpu.memory_space<vmem>>, vector<1x8xf32>,
    return
  }
  func.func @transform_0(%arg0: i32) -> (i32, i32) {
    %c0_i32 = arith.constant 0 : i32
    %c0_i32_0 = arith.constant 0 : i32
    %c0_i32_1 = arith.constant 0 : i32
    return %c0_i32, %c0_i32_0 : i32, i32
  }
  func.func @transform_1(%arg0: i32) -> (i32, i32) {
    %c0_i32 = arith.constant 0 : i32
    %c0_i32_0 = arith.constant 0 : i32
    %c0_i32_1 = arith.constant 0 : i32
    return %c0_i32, %c0_i32_0 : i32, i32
  }
  func.func @transform_2(%arg0: i32) -> (i32, i32) {
    %c0_i32 = arith.constant 0 : i32
    %c0_i32_0 = arith.constant 0 : i32
    return %arg0, %c0_i32 : i32, i32
  }
  func.func @transform_3(%arg0: i32) -> (i32, i32) {
    %c0_i32 = arith.constant 0 : i32
    %c0_i32_0 = arith.constant 0 : i32
    return %c0_i32, %arg0 : i32, i32
  }
}

</mosaic_0001>

<llo_original>
// kernel: regressor_forward.1
$region0: #{regressor_forward.1}
  #allocation0 [shape = 'u32[]', space=smem, size = 0x4, offset = 0x4, fixed_abs, tag = 'smem constant byte address 0x4 - core index']
  #allocation1 [shape = 'u32[144,128]{1,0:T(1,128)}', space=vmem, size = 0x12000, scoped, tag = 'internal scratch']
  #allocation2 [shape = 'f32[1,1]{1,0:T(1,128)S(6)}', space=smem, size = 0x200, scoped, tag = 'scoped memory for regressor_forward.1']
  %s0 = inlined_call_operand.vmem [shape: f32[1,32], index: 0, kind: input, shape index: {}]
  %s1 = inlined_call_operand.<no memory space> [shape: f32[1,1], index: 1, kind: input, shape index: {}]
  %s2 = inlined_call_operand.hbm [shape: f32[8,32], index: 2, kind: input, shape index: {}]
  %s3 = inlined_call_operand.hbm [shape: f32[1,8], index: 3, kind: output, shape index: {}]
  %s4 = sld [smem:[#allocation0]]
  $region26: #{regressor_forward.1} parent=0
    _
  %s6 = ssub.s32 1, %s4
  %s7 = scalar_select 0, %s6, %s4
  %8 = sst [smem:[#allocation2]] %s1
  $region1: #{regressor_forward.1} parent=0
    #allocation3 [shape = 'u8[4096]{0}', space=vmem, size = 0x1000, scoped, tag = 'input window, operand 2, single buffered']
    #allocation4 [shape = 's32[1]{0}', space=sflag, size = 0x4, scoped, tag = 'scoped memory for regressor_forward.1']
    #allocation5 [shape = 's32[1]{0}', space=sflag, size = 0x4, scoped, tag = 'scoped memory for regressor_forward.1']
    #allocation6 [shape = 'u8[512]{0}', space=vmem, size = 0x400, scoped, tag = 'output window, operand 0, single buffered']
    %9 = vsyncpa [#allocation4], 0
    %10 = vsyncpa [#allocation5], 0
    // Predicated region
    $region2: #{regressor_forward.1} parent=1 // pred_check
      _
    $region3: #{regressor_forward.1} parent=1 // pred_check_branch
      %12 = sbr.rel (0) target = $region5
    $region4: #{regressor_forward.1} parent=1 // pred_region
      _
    $region5: #{regressor_forward.1} parent=1 // pred_fallthru
      _
    // Predicated region
    $region6: #{regressor_forward.1} parent=1 // pred_check
      _
    $region7: #{regressor_forward.1} parent=1 // pred_check_branch
      %14 = sbr.rel (0) target = $region9
    $region8: #{regressor_forward.1} parent=1 // pred_region
      _
    $region9: #{regressor_forward.1} parent=1 // pred_fallthru
      _
    // Predicated region
    $region10: #{regressor_forward.1} parent=1 // pred_check
      _
    $region11: #{regressor_forward.1} parent=1 // pred_check_branch
      %16 = sbr.rel (0) target = $region13
    $region12: #{regressor_forward.1} parent=1 // pred_region
      %s18 = ssub.s32 128, 128
      %19 = vsyncadd [#allocation4], %s18
      %s21 = sshll.u32 [#allocation3], 4
      %s22 = int_to_ptr.vmem [resolvable:$true] %s21
      %24 = dma.hbm_to_vmem [thread:$0]  %s2, 128, %s22, [#allocation4]
    $region13: #{regressor_forward.1} parent=1 // pred_fallthru
      _
    // Predicated region
    $region14: #{regressor_forward.1} parent=1 // pred_check
      _
    $region15: #{regressor_forward.1} parent=1 // pred_check_branch
      %26 = sbr.rel (0) target = $region17
    $region16: #{regressor_forward.1} parent=1 // pred_region
      %27 = dma.done [#allocation4], 128
    $region17: #{regressor_forward.1} parent=1 // pred_fallthru
      _
    %v28 = vld [vmem:[#allocation3] sm:$0xff]
    %v29 = vld [vmem:[%s0] sm:$0x1]
    %s30 = sld [smem:[#allocation2]]
    %v31 = vstv %s30
    %vm32 = vcmask 261120
    %v34 = vsel %vm32, %v29, 0
    %v37 = vsel %vm32, %v28, 0
    %39 = vmatprep.subr.mxu0 0.0
    %40 = vmatpush1.xpose.msra.mxu0 %v37
    %41 = vmatprep.subr.mxu0 0.0
    %42 = vmatpush1.xpose.msra.mxu0 0.0
    %43 = vmatprep.subr.mxu0 0.0
    %44 = vmatpush1.xpose.msra.mxu0 0.0
    %45 = vmatprep.subr.mxu0 0.0
    %46 = vmatpush1.xpose.msra.mxu0 0.0
    %47 = vmatprep.subr.mxu0 0.0
    %48 = vmatpush1.xpose.msra.mxu0 0.0
    %49 = vmatprep.subr.mxu0 0.0
    %50 = vmatpush1.xpose.msra.mxu0 0.0
    %51 = vmatprep.subr.mxu0 0.0
    %52 = vmatpush1.xpose.msra.mxu0 0.0
    %53 = vmatprep.subr.mxu0 0.0
    %54 = vmatpush1.xpose.msra.mxu0 0.0
    %55 = vmatprep.subr.mxu0 0.0
    %56 = vmatpush1.xpose.msra.mxu0 0.0
    %57 = vmatprep.subr.mxu0 0.0
    %58 = vmatpush1.xpose.msra.mxu0 0.0
    %59 = vmatprep.subr.mxu0 0.0
    %60 = vmatpush1.xpose.msra.mxu0 0.0
    %61 = vmatprep.subr.mxu0 0.0
    %62 = vmatpush1.xpose.msra.mxu0 0.0
    %63 = vmatprep.subr.mxu0 0.0
    %64 = vmatpush1.xpose.msra.mxu0 0.0
    %65 = vmatprep.subr.mxu0 0.0
    %66 = vmatpush1.xpose.msra.mxu0 0.0
    %67 = vmatprep.subr.mxu0 0.0
    %68 = vmatpush1.xpose.msra.mxu0 0.0
    %69 = vmatprep.subr.mxu0 0.0
    %70 = vmatpush1.xpose.msra.mxu0 0.0
    %71 = vmatprep.subr.mxu0 0.0
    %72 = vmatpush1.xpose.msra.mxu0 0.0
    %73 = vmatprep.subr.mxu0 0.0
    %74 = vmatpush1.xpose.msra.mxu0 0.0
    %75 = vmatprep.subr.mxu0 0.0
    %76 = vmatpush1.xpose.msra.mxu0 0.0
    %77 = vmatprep.subr.mxu0 0.0
    %78 = vmatpush1.xpose.msra.mxu0 0.0
    %79 = vmatprep.subr.mxu0 0.0
    %80 = vmatpush1.xpose.msra.mxu0 0.0
    %81 = vmatprep.subr.mxu0 0.0
    %82 = vmatpush1.xpose.msra.mxu0 0.0
    %83 = vmatprep.subr.mxu0 0.0
    %84 = vmatpush1.xpose.msra.mxu0 0.0
    %85 = vmatprep.subr.mxu0 0.0
    %86 = vmatpush1.xpose.msra.mxu0 0.0
    %87 = vmatprep.subr.mxu0 0.0
    %88 = vmatpush1.xpose.msra.mxu0 0.0
    %89 = vmatprep.subr.mxu0 0.0
    %90 = vmatpush1.xpose.msra.mxu0 0.0
    %91 = vmatprep.subr.mxu0 0.0
    %92 = vmatpush1.xpose.msra.mxu0 0.0
    %93 = vmatprep.subr.mxu0 0.0
    %94 = vmatpush1.xpose.msra.mxu0 0.0
    %95 = vmatprep.subr.mxu0 0.0
    %96 = vmatpush1.xpose.msra.mxu0 0.0
    %97 = vmatprep.subr.mxu0 0.0
    %98 = vmatpush1.xpose.msra.mxu0 0.0
    %99 = vmatprep.subr.mxu0 0.0
    %100 = vmatpush1.xpose.msra.mxu0 0.0
    %101 = vmatprep.subr.mxu0 0.0
    %102 = vmatpush1.xpose.msra.mxu0 0.0
    %103 = vmatprep.mubr.f32.mxu0 0.0
    %104 = vmatmul.mubr.f32.gmra.mrb[0].mxu0 %v34
    %v105 = vpop.f32.mrb[0].mxu0
    %v106 = vadd.f32 %v31, %v105
    %v107 = vpop.f32.mrb[0].mxu0
    %108 = vdwg.mxu0
    %vm109 = vcmask 57344
    %110 = vst.msk [vmem:[#allocation6] sm:$0x1] %vm109, %v106
    // Predicated region
    $region18: #{regressor_forward.1} parent=1 // pred_check
      _
    $region19: #{regressor_forward.1} parent=1 // pred_check_branch
      %112 = sbr.rel (0) target = $region21
    $region20: #{regressor_forward.1} parent=1 // pred_region
      %s114 = ssub.s32 16, 16
      %115 = vsyncadd [#allocation5], %s114
      %s117 = sshll.u32 [#allocation6], 4
      %s118 = int_to_ptr.vmem [resolvable:$true] %s117
      %120 = dma.vmem_to_hbm [thread:$0]  %s118, 16, %s3, [#allocation5]
    $region21: #{regressor_forward.1} parent=1 // pred_fallthru
      _
    // Predicated region
    $region22: #{regressor_forward.1} parent=1 // pred_check
      _
    $region23: #{regressor_forward.1} parent=1 // pred_check_branch
      %122 = sbr.rel (0) target = $region25
    $region24: #{regressor_forward.1} parent=1 // pred_region
      %123 = dma.done [#allocation5], 16
    $region25: #{regressor_forward.1} parent=1 // pred_fallthru
      _
    %124 = vsyncpa [#allocation4], 1
    %125 = vsyncpa [#allocation5], 1

</llo_original>
